<compile_context>
chip_gen: v5e
topology: v5e:2x2
jax: 0.10.0
libtpu: 0.0.40
codegen_flags: <defaults>
</compile_context>

<pallas_src>
import numpy as np
import jax
import jax.numpy as jnp
from jax.experimental import pallas as pl
from jax.experimental.pallas import tpu as pltpu


# -----------------------------------------------------------------------------
# Host-side constant builders (run once, outside the hot path)
# -----------------------------------------------------------------------------
def prepare_encoder(conv_params, lin_w, lin_b, *, height, width, kernel_size,
                    pool_list, latent_pad, eps=1e-5):
    """Fold BN(inference) + conv bias into banded per-layer matrices / shift rows
    and pre-permute + zero-pad the linear weight for the in-kernel lane layout.

    Activation layout per image: rows = height (i), lanes = (width j, channel c);
    logical column j of layer l's input occupies lanes [in_cols[j], in_cols[j]+cin).
    """
    n_layer = len(conv_params)
    dims, op_args = [], []
    h_cur, w_cur = height, width
    in_w = width
    in_cols = list(range(width))            # layer-0 input: 1 channel, lane j = column j

    for l in range(n_layer):
        cp = conv_params[l]
        k, p = kernel_size[l], pool_list[l]
        w_np = np.asarray(cp["w"], np.float32)          # (k, k, cin, cout)
        cin, cout = w_np.shape[2], w_np.shape[3]
        pad = (k - 1) // 2
        scale = np.asarray(cp["gamma"], np.float32) / np.sqrt(
            np.asarray(cp["var"], np.float32) + eps)
        shift_c = (np.asarray(cp["b"], np.float32) - np.asarray(cp["mean"], np.float32)) \
            * scale + np.asarray(cp["beta"], np.float32)
        wf = w_np * scale                               # fold BN scale into the conv taps

        out_w = w_cur * cout
        B = np.zeros((k, in_w, out_w), np.float32)      # banded conv matrices, one per kh
        for kh in range(k):
            for j_out in range(w_cur):
                for kw in range(k):
                    j_src = j_out + kw - pad            # horizontal 'same' padding folded in
                    if 0 <= j_src < w_cur:
                        r0, c0 = in_cols[j_src], j_out * cout
                        B[kh, r0:r0 + cin, c0:c0 + cout] = wf[kh, kw]
        shift_row = np.tile(shift_c, w_cur).reshape(1, out_w)

        h_next, w_next = h_cur // p, w_cur // p
        nw = (p * (w_next - 1) + 1) * cout              # lane width after pooling
        dims.append(dict(h=h_cur, w=w_cur, k=k, p=p, cin=cin, cout=cout, pad=pad,
                         in_w=in_w, out_w=out_w, nw=nw))
        op_args += [jnp.asarray(B), jnp.asarray(shift_row)]

        in_cols = [p * jo * cout for jo in range(w_next)]
        in_w = nw
        h_cur, w_cur = h_next, w_next

    # Flatten (PyTorch NCHW order (c, i, j)) + Linear, pre-permuted and lane-padded.
    c_last = int(conv_params[-1]["w"].shape[3])
    s_last = h_cur * w_cur
    latent = int(lin_w.shape[1])
    lw = np.asarray(lin_w, np.float32)
    WL = np.zeros((h_cur, in_w, latent_pad), np.float32)
    for io in range(h_cur):
        for jo in range(w_cur):
            for c in range(c_last):
                WL[io, in_cols[jo] + c, :latent] = lw[c * s_last + io * w_cur + jo]
    bias = np.zeros((1, latent_pad), np.float32)
    bias[0, :latent] = np.asarray(lin_b, np.float32)
    op_args += [jnp.asarray(WL), jnp.asarray(bias)]

    final_info = dict(h_last=h_cur, w_last=w_cur, in_w_last=in_w, latent_pad=latent_pad)
    return tuple(op_args), dims, final_info


# -----------------------------------------------------------------------------
# Fused Pallas kernel (one batch element per grid step)
# -----------------------------------------------------------------------------
def _make_encoder_kernel(dims, latent_pad):
    n_layer = len(dims)

    def kernel(*refs):
        x_ref = refs[0]
        layer_refs = [(refs[1 + 2 * l], refs[2 + 2 * l]) for l in range(n_layer)]
        wl_ref, bias_ref = refs[1 + 2 * n_layer], refs[2 + 2 * n_layer]
        o_ref = refs[3 + 2 * n_layer]
        act_refs = refs[4 + 2 * n_layer:]               # per-layer haloed activation scratch

        # stage the input image (rows = i, lanes = j; layer 0 has a single channel)
        d0 = dims[0]
        a0 = act_refs[0]
        if d0["pad"] > 0:
            zrow = jnp.zeros((d0["pad"], d0["in_w"]), jnp.float32)
            a0[pl.ds(0, d0["pad"]), :] = zrow
            a0[pl.ds(d0["pad"] + d0["h"], d0["pad"]), :] = zrow
        a0[pl.ds(d0["pad"], d0["h"]), :] = x_ref[0]

        acc = bias_ref[...]                             # (1, latent_pad) output accumulator
        for l, d in enumerate(dims):
            b_ref, s_ref = layer_refs[l]
            cur = act_refs[l]
            # ---- Conv2d + folded BN: K banded matmuls over row-shifted views -------
            y = jnp.dot(cur[pl.ds(0, d["h"]), :], b_ref[0],
                        preferred_element_type=jnp.float32)
            for kh in range(1, d["k"]):
                y = y + jnp.dot(cur[pl.ds(kh, d["h"]), :], b_ref[kh],
                                preferred_element_type=jnp.float32)
            y = y + s_ref[...]                          # BN shift before the max-pool
            # ---- MaxPool: horizontal max over lane-shifted slices ------------------
            z = y[:, 0:d["nw"]]
            for pj in range(1, d["p"]):
                z = jnp.maximum(z, y[:, pj * d["cout"]: pj * d["cout"] + d["nw"]])
            # ---- vertical max + row subsample + ReLU (+ next layer / linear) -------
            h_next = d["h"] // d["p"]
            last = (l + 1 == n_layer)
            if not last:
                dn = dims[l + 1]
                nxt = act_refs[l + 1]
                if dn["pad"] > 0:
                    zrow = jnp.zeros((dn["pad"], dn["in_w"]), jnp.float32)
                    nxt[pl.ds(0, dn["pad"]), :] = zrow
                    nxt[pl.ds(dn["pad"] + dn["h"], dn["pad"]), :] = zrow
            for io in range(h_next):
                v = z[d["p"] * io: d["p"] * io + 1, :]
                for pi in range(1, d["p"]):
                    v = jnp.maximum(v, z[d["p"] * io + pi: d["p"] * io + pi + 1, :])
                v = jnp.maximum(v, 0.0)                 # ReLU
                if last:
                    # Flatten is folded into wl; accumulate the linear per output row.
                    acc = acc + jnp.dot(v, wl_ref[io],
                                        preferred_element_type=jnp.float32)
                else:
                    nxt[pl.ds(dn["pad"] + io, 1), :] = v

        o_ref[0] = acc                                  # lane-dense (1, latent_pad) store

    return kernel


def make_encoder_forward(dims, final_info, *, n_batch, height, width, latent_dim,
                         latent_pad):
    n_layer = len(dims)
    kernel = _make_encoder_kernel(dims, latent_pad)

    def _const_spec(shape):
        nd = len(shape)
        return pl.BlockSpec(shape, lambda n, _nd=nd: (0,) * _nd)

    in_specs = [pl.BlockSpec((1, height, width), lambda n: (n, 0, 0))]
    const_shapes = []
    for d in dims:
        const_shapes += [(d["k"], d["in_w"], d["out_w"]), (1, d["out_w"])]
    const_shapes += [(final_info["h_last"], final_info["in_w_last"], latent_pad),
                     (1, latent_pad)]
    in_specs += [_const_spec(s) for s in const_shapes]
    out_spec = pl.BlockSpec((1, 1, latent_pad), lambda n: (n, 0, 0))
    scratch = [pltpu.VMEM((d["h"] + 2 * d["pad"], d["in_w"]), jnp.float32) for d in dims]

    flops = 0
    for d in dims:
        flops += 2 * d["k"] * d["h"] * d["in_w"] * d["out_w"]
    flops += 2 * final_info["h_last"] * final_info["in_w_last"] * latent_pad
    flops *= n_batch
    const_bytes = 4 * sum(int(np.prod(s)) for s in const_shapes)
    bytes_accessed = const_bytes + 4 * n_batch * (height * width + latent_pad)
    resident = const_bytes + 4 * (height * width + latent_pad
                                  + sum((d["h"] + 2 * d["pad"]) * d["in_w"] for d in dims))
    vmem_limit = int(min(64 * 2 ** 20, max(4 * 2 ** 20, 16 * resident)))

    call = pl.pallas_call(
        kernel,
        out_shape=jax.ShapeDtypeStruct((n_batch, 1, latent_pad), jnp.float32),
        grid_spec=pltpu.PrefetchScalarGridSpec(
            num_scalar_prefetch=0,
            grid=(n_batch,),
            in_specs=in_specs,
            out_specs=out_spec,
            scratch_shapes=scratch),
        compiler_params=pltpu.CompilerParams(
            dimension_semantics=("parallel",),          # shards the batch over v7x's 2 TCs
            vmem_limit_bytes=vmem_limit),
        cost_estimate=pl.CostEstimate(flops=flops, transcendentals=0,
                                      bytes_accessed=bytes_accessed),
    )

    @jax.jit
    def forward(x_nchw, op_args):
        x = x_nchw.reshape(n_batch, height, width)      # first conv layer has cin = 1
        out = call(x, *op_args)
        return out[:, 0, :latent_dim]

    return forward


# -----------------------------------------------------------------------------
# Parameters + pure-JAX reference (built-in correctness check)
# -----------------------------------------------------------------------------
def init_encoder_params(key, *, chan, n_layer, kernel_size, latent_dim, flatten_len):
    conv_params = []
    for i in range(n_layer):
        cin = 1 if i == 0 else chan[i - 1]
        cout, k = chan[i], kernel_size[i]
        key, k1, k2, k3, k4, k5, k6 = jax.random.split(key, 7)
        fan_in = cin * k * k
        conv_params.append(dict(
            w=jax.random.normal(k1, (k, k, cin, cout), jnp.float32) / jnp.sqrt(fan_in),
            b=jax.random.normal(k2, (cout,), jnp.float32) * 0.1,
            gamma=1.0 + 0.1 * jax.random.normal(k3, (cout,), jnp.float32),
            beta=0.1 * jax.random.normal(k4, (cout,), jnp.float32),
            mean=0.1 * jax.random.normal(k5, (cout,), jnp.float32),
            var=jax.random.uniform(k6, (cout,), jnp.float32, 0.5, 1.5),
        ))
    key, k1, k2 = jax.random.split(key, 3)
    lin_w = jax.random.normal(k1, (flatten_len, latent_dim), jnp.float32) / jnp.sqrt(flatten_len)
    lin_b = jax.random.normal(k2, (latent_dim,), jnp.float32) * 0.01
    return conv_params, lin_w, lin_b


def reference_forward(x_nchw, conv_params, lin_w, lin_b, pool_list, eps=1e-5):
    """Pure-JAX/XLA reference of the PyTorch module (inference-mode BatchNorm)."""
    x = x_nchw
    for cp, pool in zip(conv_params, pool_list):
        w_oihw = jnp.transpose(cp["w"], (3, 2, 0, 1))
        y = jax.lax.conv_general_dilated(
            x, w_oihw, window_strides=(1, 1), padding="SAME",
            dimension_numbers=("NCHW", "OIHW", "NCHW"))
        y = y + cp["b"][None, :, None, None]
        scale = (cp["gamma"] / jnp.sqrt(cp["var"] + eps))[None, :, None, None]
        y = (y - cp["mean"][None, :, None, None]) * scale + cp["beta"][None, :, None, None]
        y = jax.lax.reduce_window(y, -jnp.inf, jax.lax.max,
                                  (1, 1, pool, pool), (1, 1, pool, pool), "VALID")
        x = jnp.maximum(y, 0.0)
    return x.reshape(x.shape[0], -1) @ lin_w + lin_b


# -----------------------------------------------------------------------------
if __name__ == "__main__":
    chan = [4, 8]
    n_layer = 2
    kernel_size = [3, 3]
    pool_list = [2, 2]
    latent_dim = 32
    H = W = 16
    N = 2
    flatten_len = chan[-1] * (H // (pool_list[0] * pool_list[1])) ** 2   # 8 * 4 * 4 = 128

    key = jax.random.PRNGKey(0)
    kx, kp = jax.random.split(key)
    x = jax.random.normal(kx, (N, 1, H, W), jnp.float32)                 # NCHW like PyTorch

    conv_params, lin_w, lin_b = init_encoder_params(
        kp, chan=chan, n_layer=n_layer, kernel_size=kernel_size,
        latent_dim=latent_dim, flatten_len=flatten_len)

    latent_pad = max(128, ((latent_dim + 127) // 128) * 128)
    op_args, dims, final_info = prepare_encoder(
        conv_params, lin_w, lin_b, height=H, width=W,
        kernel_size=kernel_size, pool_list=pool_list, latent_pad=latent_pad)
    forward = make_encoder_forward(
        dims, final_info, n_batch=N, height=H, width=W,
        latent_dim=latent_dim, latent_pad=latent_pad)

    out = jax.block_until_ready(forward(x, op_args))
    assert out.shape == (N, latent_dim), out.shape

    ref = jax.block_until_ready(reference_forward(x, conv_params, lin_w, lin_b, pool_list))
    err = float(np.max(np.abs(np.asarray(out) - np.asarray(ref))))
    assert np.allclose(np.asarray(out), np.asarray(ref), rtol=1e-4, atol=1e-4), err

    print("KERNEL_OK")
</pallas_src>

<mosaic_0001>
module attributes {stable_mosaic.version = 11 : i64} {
  func.func @kernel(%arg0: i32, %arg1: memref<1x16x16xf32, #tpu.memory_space<vmem>>, %arg2: memref<3x16x64xf32, #tpu.memory_space<vmem>>, %arg3: memref<1x64xf32, #tpu.memory_space<vmem>>, %arg4: memref<3x60x64xf32, #tpu.memory_space<vmem>>, %arg5: memref<1x64xf32, #tpu.memory_space<vmem>>, %arg6: memref<4x56x128xf32, #tpu.memory_space<vmem>>, %arg7: memref<1x128xf32, #tpu.memory_space<vmem>>, %arg8: memref<1x1x128xf32, #tpu.memory_space<vmem>>, %arg9: memref<18x16xf32, #tpu.memory_space<vmem>>, %arg10: memref<10x60xf32, #tpu.memory_space<vmem>>) attributes {dimension_semantics = [#tpu.dimension_semantics<parallel>], iteration_bounds = array<i64: 2>, scalar_prefetch = 0 : i64, scratch_operands = 2 : i64, tpu.core_type = #tpu.core_type<tc>, window_params = [{transform_indices = @transform_0, window_bounds = array<i64: 1, 16, 16>}, {pipeline_mode = #tpu.pipeline_mode<synchronous>, transform_indices = @transform_1, window_bounds = array<i64: 3, 16, 64>}, {pipeline_mode = #tpu.pipeline_mode<synchronous>, transform_indices = @transform_2, window_bounds = array<i64: 1, 64>}, {pipeline_mode = #tpu.pipeline_mode<synchronous>, transform_indices = @transform_3, window_bounds = array<i64: 3, 60, 64>}, {pipeline_mode = #tpu.pipeline_mode<synchronous>, transform_indices = @transform_4, window_bounds = array<i64: 1, 64>}, {pipeline_mode = #tpu.pipeline_mode<synchronous>, transform_indices = @transform_5, window_bounds = array<i64: 4, 56, 128>}, {pipeline_mode = #tpu.pipeline_mode<synchronous>, transform_indices = @transform_6, window_bounds = array<i64: 1, 128>}, {transform_indices = @transform_7, window_bounds = array<i64: 1, 1, 128>}]} {
    %cst = arith.constant 0.000000e+00 : f32
    %0 = vector.broadcast %cst : f32 to vector<1x16xf32>
    %c0 = arith.constant 0 : index
    %c0_0 = arith.constant 0 : index
    %1 = vector.load %arg9[%c0, %c0_0] : memref<18x16xf32, #tpu.memory_space<vmem>>, vector<1x16xf32>
    tpu.vector_store %arg9[%c0, %c0_0], %0 {strides = array<i32>} : memref<18x16xf32, #tpu.memory_space<vmem>>, vector<1x16xf32>,
    %c17 = arith.constant 17 : index
    %c0_1 = arith.constant 0 : index
    %2 = vector.load %arg9[%c17, %c0_1] : memref<18x16xf32, #tpu.memory_space<vmem>>, vector<1x16xf32>
    tpu.vector_store %arg9[%c17, %c0_1], %0 {strides = array<i32>} : memref<18x16xf32, #tpu.memory_space<vmem>>, vector<1x16xf32>,
    %c0_2 = arith.constant 0 : index
    %c0_3 = arith.constant 0 : index
    %c0_4 = arith.constant 0 : index
    %3 = vector.load %arg1[%c0_2, %c0_3, %c0_4] : memref<1x16x16xf32, #tpu.memory_space<vmem>>, vector<1x16x16xf32>
    %4 = vector.shape_cast %3 : vector<1x16x16xf32> to vector<16x16xf32>
    %c1 = arith.constant 1 : index
    %c0_5 = arith.constant 0 : index
    %5 = vector.load %arg9[%c1, %c0_5] : memref<18x16xf32, #tpu.memory_space<vmem>>, vector<16x16xf32>
    tpu.vector_store %arg9[%c1, %c0_5], %4 {strides = array<i32>} : memref<18x16xf32, #tpu.memory_space<vmem>>, vector<16x16xf32>,
    %c0_6 = arith.constant 0 : index
    %c0_7 = arith.constant 0 : index
    %6 = vector.load %arg7[%c0_6, %c0_7] : memref<1x128xf32, #tpu.memory_space<vmem>>, vector<1x128xf32>
    %c0_8 = arith.constant 0 : index
    %c0_9 = arith.constant 0 : index
    %7 = vector.load %arg9[%c0_8, %c0_9] : memref<18x16xf32, #tpu.memory_space<vmem>>, vector<16x16xf32>
    %c0_10 = arith.constant 0 : index
    %c0_11 = arith.constant 0 : index
    %c0_12 = arith.constant 0 : index
    %8 = vector.load %arg2[%c0_10, %c0_11, %c0_12] : memref<3x16x64xf32, #tpu.memory_space<vmem>>, vector<1x16x64xf32>
    %9 = vector.shape_cast %8 : vector<1x16x64xf32> to vector<16x64xf32>
    %cst_13 = arith.constant dense<0.000000e+00> : vector<16x64xf32>
    %10 = tpu.matmul %7, %9, %cst_13 {dimension_numbers = #tpu.dot_dimension_numbers<[1], [0], [0], [1], [0, 0, 1, 1], [], []>} : vector<16x16xf32>, vector<16x64xf32>, vector<16x64xf32> -> vector<16x64xf32>
    %c1_14 = arith.constant 1 : index
    %c0_15 = arith.constant 0 : index
    %11 = vector.load %arg9[%c1_14, %c0_15] : memref<18x16xf32, #tpu.memory_space<vmem>>, vector<16x16xf32>
    %c1_16 = arith.constant 1 : index
    %c0_17 = arith.constant 0 : index
    %c0_18 = arith.constant 0 : index
    %12 = vector.load %arg2[%c1_16, %c0_17, %c0_18] : memref<3x16x64xf32, #tpu.memory_space<vmem>>, vector<1x16x64xf32>
    %13 = vector.shape_cast %12 : vector<1x16x64xf32> to vector<16x64xf32>
    %cst_19 = arith.constant dense<0.000000e+00> : vector<16x64xf32>
    %14 = tpu.matmul %11, %13, %cst_19 {dimension_numbers = #tpu.dot_dimension_numbers<[1], [0], [0], [1], [0, 0, 1, 1], [], []>} : vector<16x16xf32>, vector<16x64xf32>, vector<16x64xf32> -> vector<16x64xf32>
    %15 = arith.addf %10, %14 : vector<16x64xf32>
    %c2 = arith.constant 2 : index
    %c0_20 = arith.constant 0 : index
    %16 = vector.load %arg9[%c2, %c0_20] : memref<18x16xf32, #tpu.memory_space<vmem>>, vector<16x16xf32>
    %c2_21 = arith.constant 2 : index
    %c0_22 = arith.constant 0 : index
    %c0_23 = arith.constant 0 : index
    %17 = vector.load %arg2[%c2_21, %c0_22, %c0_23] : memref<3x16x64xf32, #tpu.memory_space<vmem>>, vector<1x16x64xf32>
    %18 = vector.shape_cast %17 : vector<1x16x64xf32> to vector<16x64xf32>
    %cst_24 = arith.constant dense<0.000000e+00> : vector<16x64xf32>
    %19 = tpu.matmul %16, %18, %cst_24 {dimension_numbers = #tpu.dot_dimension_numbers<[1], [0], [0], [1], [0, 0, 1, 1], [], []>} : vector<16x16xf32>, vector<16x64xf32>, vector<16x64xf32> -> vector<16x64xf32>
    %20 = arith.addf %15, %19 : vector<16x64xf32>
    %c0_25 = arith.constant 0 : index
    %c0_26 = arith.constant 0 : index
    %21 = vector.load %arg3[%c0_25, %c0_26] : memref<1x64xf32, #tpu.memory_space<vmem>>, vector<1x64xf32>
    %22 = vector.broadcast %21 : vector<1x64xf32> to vector<16x64xf32>
    %23 = arith.addf %20, %22 : vector<16x64xf32>
    %24 = vector.extract_strided_slice %23 {offsets = [0, 0], sizes = [16, 60], strides = [1, 1]} : vector<16x64xf32> to vector<16x60xf32>
    %25 = vector.extract_strided_slice %23 {offsets = [0, 4], sizes = [16, 60], strides = [1, 1]} : vector<16x64xf32> to vector<16x60xf32>
    %26 = arith.maximumf %24, %25 : vector<16x60xf32>
    %cst_27 = arith.constant 0.000000e+00 : f32
    %27 = vector.broadcast %cst_27 : f32 to vector<1x60xf32>
    %c0_28 = arith.constant 0 : index
    %c0_29 = arith.constant 0 : index
    %28 = vector.load %arg10[%c0_28, %c0_29] : memref<10x60xf32, #tpu.memory_space<vmem>>, vector<1x60xf32>
    tpu.vector_store %arg10[%c0_28, %c0_29], %27 {strides = array<i32>} : memref<10x60xf32, #tpu.memory_space<vmem>>, vector<1x60xf32>,
    %c9 = arith.constant 9 : index
    %c0_30 = arith.constant 0 : index
    %29 = vector.load %arg10[%c9, %c0_30] : memref<10x60xf32, #tpu.memory_space<vmem>>, vector<1x60xf32>
    tpu.vector_store %arg10[%c9, %c0_30], %27 {strides = array<i32>} : memref<10x60xf32, #tpu.memory_space<vmem>>, vector<1x60xf32>,
    %30 = vector.extract_strided_slice %26 {offsets = [0, 0], sizes = [1, 60], strides = [1, 1]} : vector<16x60xf32> to vector<1x60xf32>
    %31 = vector.extract_strided_slice %26 {offsets = [1, 0], sizes = [1, 60], strides = [1, 1]} : vector<16x60xf32> to vector<1x60xf32>
    %32 = arith.maximumf %30, %31 : vector<1x60xf32>
    %cst_31 = arith.constant 0.000000e+00 : f32
    %33 = vector.broadcast %cst_31 : f32 to vector<1x60xf32>
    %34 = arith.maximumf %32, %33 : vector<1x60xf32>
    %c1_32 = arith.constant 1 : index
    %c0_33 = arith.constant 0 : index
    %35 = vector.load %arg10[%c1_32, %c0_33] : memref<10x60xf32, #tpu.memory_space<vmem>>, vector<1x60xf32>
    tpu.vector_store %arg10[%c1_32, %c0_33], %34 {strides = array<i32>} : memref<10x60xf32, #tpu.memory_space<vmem>>, vector<1x60xf32>,
    %36 = vector.extract_strided_slice %26 {offsets = [2, 0], sizes = [1, 60], strides = [1, 1]} : vector<16x60xf32> to vector<1x60xf32>
    %37 = vector.extract_strided_slice %26 {offsets = [3, 0], sizes = [1, 60], strides = [1, 1]} : vector<16x60xf32> to vector<1x60xf32>
    %38 = arith.maximumf %36, %37 : vector<1x60xf32>
    %cst_34 = arith.constant 0.000000e+00 : f32
    %39 = vector.broadcast %cst_34 : f32 to vector<1x60xf32>
    %40 = arith.maximumf %38, %39 : vector<1x60xf32>
    %c2_35 = arith.constant 2 : index
    %c0_36 = arith.constant 0 : index
    %41 = vector.load %arg10[%c2_35, %c0_36] : memref<10x60xf32, #tpu.memory_space<vmem>>, vector<1x60xf32>
    tpu.vector_store %arg10[%c2_35, %c0_36], %40 {strides = array<i32>} : memref<10x60xf32, #tpu.memory_space<vmem>>, vector<1x60xf32>,
    %42 = vector.extract_strided_slice %26 {offsets = [4, 0], sizes = [1, 60], strides = [1, 1]} : vector<16x60xf32> to vector<1x60xf32>
    %43 = vector.extract_strided_slice %26 {offsets = [5, 0], sizes = [1, 60], strides = [1, 1]} : vector<16x60xf32> to vector<1x60xf32>
    %44 = arith.maximumf %42, %43 : vector<1x60xf32>
    %cst_37 = arith.constant 0.000000e+00 : f32
    %45 = vector.broadcast %cst_37 : f32 to vector<1x60xf32>
    %46 = arith.maximumf %44, %45 : vector<1x60xf32>
    %c3 = arith.constant 3 : index
    %c0_38 = arith.constant 0 : index
    %47 = vector.load %arg10[%c3, %c0_38] : memref<10x60xf32, #tpu.memory_space<vmem>>, vector<1x60xf32>
    tpu.vector_store %arg10[%c3, %c0_38], %46 {strides = array<i32>} : memref<10x60xf32, #tpu.memory_space<vmem>>, vector<1x60xf32>,
    %48 = vector.extract_strided_slice %26 {offsets = [6, 0], sizes = [1, 60], strides = [1, 1]} : vector<16x60xf32> to vector<1x60xf32>
    %49 = vector.extract_strided_slice %26 {offsets = [7, 0], sizes = [1, 60], strides = [1, 1]} : vector<16x60xf32> to vector<1x60xf32>
    %50 = arith.maximumf %48, %49 : vector<1x60xf32>
    %cst_39 = arith.constant 0.000000e+00 : f32
    %51 = vector.broadcast %cst_39 : f32 to vector<1x60xf32>
    %52 = arith.maximumf %50, %51 : vector<1x60xf32>
    %c4 = arith.constant 4 : index
    %c0_40 = arith.constant 0 : index
    %53 = vector.load %arg10[%c4, %c0_40] : memref<10x60xf32, #tpu.memory_space<vmem>>, vector<1x60xf32>
    tpu.vector_store %arg10[%c4, %c0_40], %52 {strides = array<i32>} : memref<10x60xf32, #tpu.memory_space<vmem>>, vector<1x60xf32>,
    %54 = vector.extract_strided_slice %26 {offsets = [8, 0], sizes = [1, 60], strides = [1, 1]} : vector<16x60xf32> to vector<1x60xf32>
    %55 = vector.extract_strided_slice %26 {offsets = [9, 0], sizes = [1, 60], strides = [1, 1]} : vector<16x60xf32> to vector<1x60xf32>
    %56 = arith.maximumf %54, %55 : vector<1x60xf32>
    %cst_41 = arith.constant 0.000000e+00 : f32
    %57 = vector.broadcast %cst_41 : f32 to vector<1x60xf32>
    %58 = arith.maximumf %56, %57 : vector<1x60xf32>
    %c5 = arith.constant 5 : index
    %c0_42 = arith.constant 0 : index
    %59 = vector.load %arg10[%c5, %c0_42] : memref<10x60xf32, #tpu.memory_space<vmem>>, vector<1x60xf32>
    tpu.vector_store %arg10[%c5, %c0_42], %58 {strides = array<i32>} : memref<10x60xf32, #tpu.memory_space<vmem>>, vector<1x60xf32>,
    %60 = vector.extract_strided_slice %26 {offsets = [10, 0], sizes = [1, 60], strides = [1, 1]} : vector<16x60xf32> to vector<1x60xf32>
    %61 = vector.extract_strided_slice %26 {offsets = [11, 0], sizes = [1, 60], strides = [1, 1]} : vector<16x60xf32> to vector<1x60xf32>
    %62 = arith.maximumf %60, %61 : vector<1x60xf32>
    %cst_43 = arith.constant 0.000000e+00 : f32
    %63 = vector.broadcast %cst_43 : f32 to vector<1x60xf32>
    %64 = arith.maximumf %62, %63 : vector<1x60xf32>
    %c6 = arith.constant 6 : index
    %c0_44 = arith.constant 0 : index
    %65 = vector.load %arg10[%c6, %c0_44] : memref<10x60xf32, #tpu.memory_space<vmem>>, vector<1x60xf32>
    tpu.vector_store %arg10[%c6, %c0_44], %64 {strides = array<i32>} : memref<10x60xf32, #tpu.memory_space<vmem>>, vector<1x60xf32>,
    %66 = vector.extract_strided_slice %26 {offsets = [12, 0], sizes = [1, 60], strides = [1, 1]} : vector<16x60xf32> to vector<1x60xf32>
    %67 = vector.extract_strided_slice %26 {offsets = [13, 0], sizes = [1, 60], strides = [1, 1]} : vector<16x60xf32> to vector<1x60xf32>
    %68 = arith.maximumf %66, %67 : vector<1x60xf32>
    %cst_45 = arith.constant 0.000000e+00 : f32
    %69 = vector.broadcast %cst_45 : f32 to vector<1x60xf32>
    %70 = arith.maximumf %68, %69 : vector<1x60xf32>
    %c7 = arith.constant 7 : index
    %c0_46 = arith.constant 0 : index
    %71 = vector.load %arg10[%c7, %c0_46] : memref<10x60xf32, #tpu.memory_space<vmem>>, vector<1x60xf32>
    tpu.vector_store %arg10[%c7, %c0_46], %70 {strides = array<i32>} : memref<10x60xf32, #tpu.memory_space<vmem>>, vector<1x60xf32>,
    %72 = vector.extract_strided_slice %26 {offsets = [14, 0], sizes = [1, 60], strides = [1, 1]} : vector<16x60xf32> to vector<1x60xf32>
    %73 = vector.extract_strided_slice %26 {offsets = [15, 0], sizes = [1, 60], strides = [1, 1]} : vector<16x60xf32> to vector<1x60xf32>
    %74 = arith.maximumf %72, %73 : vector<1x60xf32>
    %cst_47 = arith.constant 0.000000e+00 : f32
    %75 = vector.broadcast %cst_47 : f32 to vector<1x60xf32>
    %76 = arith.maximumf %74, %75 : vector<1x60xf32>
    %c8 = arith.constant 8 : index
    %c0_48 = arith.constant 0 : index
    %77 = vector.load %arg10[%c8, %c0_48] : memref<10x60xf32, #tpu.memory_space<vmem>>, vector<1x60xf32>
    tpu.vector_store %arg10[%c8, %c0_48], %76 {strides = array<i32>} : memref<10x60xf32, #tpu.memory_space<vmem>>, vector<1x60xf32>,
    %c0_49 = arith.constant 0 : index
    %c0_50 = arith.constant 0 : index
    %78 = vector.load %arg10[%c0_49, %c0_50] : memref<10x60xf32, #tpu.memory_space<vmem>>, vector<8x60xf32>
    %c0_51 = arith.constant 0 : index
    %c0_52 = arith.constant 0 : index
    %c0_53 = arith.constant 0 : index
    %79 = vector.load %arg4[%c0_51, %c0_52, %c0_53] : memref<3x60x64xf32, #tpu.memory_space<vmem>>, vector<1x60x64xf32>
    %80 = vector.shape_cast %79 : vector<1x60x64xf32> to vector<60x64xf32>
    %cst_54 = arith.constant dense<0.000000e+00> : vector<8x64xf32>
    %81 = tpu.matmul %78, %80, %cst_54 {dimension_numbers = #tpu.dot_dimension_numbers<[1], [0], [0], [1], [0, 0, 1, 1], [], []>} : vector<8x60xf32>, vector<60x64xf32>, vector<8x64xf32> -> vector<8x64xf32>
    %c1_55 = arith.constant 1 : index
    %c0_56 = arith.constant 0 : index
    %82 = vector.load %arg10[%c1_55, %c0_56] : memref<10x60xf32, #tpu.memory_space<vmem>>, vector<8x60xf32>
    %c1_57 = arith.constant 1 : index
    %c0_58 = arith.constant 0 : index
    %c0_59 = arith.constant 0 : index
    %83 = vector.load %arg4[%c1_57, %c0_58, %c0_59] : memref<3x60x64xf32, #tpu.memory_space<vmem>>, vector<1x60x64xf32>
    %84 = vector.shape_cast %83 : vector<1x60x64xf32> to vector<60x64xf32>
    %cst_60 = arith.constant dense<0.000000e+00> : vector<8x64xf32>
    %85 = tpu.matmul %82, %84, %cst_60 {dimension_numbers = #tpu.dot_dimension_numbers<[1], [0], [0], [1], [0, 0, 1, 1], [], []>} : vector<8x60xf32>, vector<60x64xf32>, vector<8x64xf32> -> vector<8x64xf32>
    %86 = arith.addf %81, %85 : vector<8x64xf32>
    %c2_61 = arith.constant 2 : index
    %c0_62 = arith.constant 0 : index
    %87 = vector.load %arg10[%c2_61, %c0_62] : memref<10x60xf32, #tpu.memory_space<vmem>>, vector<8x60xf32>
    %c2_63 = arith.constant 2 : index
    %c0_64 = arith.constant 0 : index
    %c0_65 = arith.constant 0 : index
    %88 = vector.load %arg4[%c2_63, %c0_64, %c0_65] : memref<3x60x64xf32, #tpu.memory_space<vmem>>, vector<1x60x64xf32>
    %89 = vector.shape_cast %88 : vector<1x60x64xf32> to vector<60x64xf32>
    %cst_66 = arith.constant dense<0.000000e+00> : vector<8x64xf32>
    %90 = tpu.matmul %87, %89, %cst_66 {dimension_numbers = #tpu.dot_dimension_numbers<[1], [0], [0], [1], [0, 0, 1, 1], [], []>} : vector<8x60xf32>, vector<60x64xf32>, vector<8x64xf32> -> vector<8x64xf32>
    %91 = arith.addf %86, %90 : vector<8x64xf32>
    %c0_67 = arith.constant 0 : index
    %c0_68 = arith.constant 0 : index
    %92 = vector.load %arg5[%c0_67, %c0_68] : memref<1x64xf32, #tpu.memory_space<vmem>>, vector<1x64xf32>
    %93 = vector.broadcast %92 : vector<1x64xf32> to vector<8x64xf32>
    %94 = arith.addf %91, %93 : vector<8x64xf32>
    %95 = vector.extract_strided_slice %94 {offsets = [0, 0], sizes = [8, 56], strides = [1, 1]} : vector<8x64xf32> to vector<8x56xf32>
    %96 = vector.extract_strided_slice %94 {offsets = [0, 8], sizes = [8, 56], strides = [1, 1]} : vector<8x64xf32> to vector<8x56xf32>
    %97 = arith.maximumf %95, %96 : vector<8x56xf32>
    %98 = vector.extract_strided_slice %97 {offsets = [0, 0], sizes = [1, 56], strides = [1, 1]} : vector<8x56xf32> to vector<1x56xf32>
    %99 = vector.extract_strided_slice %97 {offsets = [1, 0], sizes = [1, 56], strides = [1, 1]} : vector<8x56xf32> to vector<1x56xf32>
    %100 = arith.maximumf %98, %99 : vector<1x56xf32>
    %cst_69 = arith.constant 0.000000e+00 : f32
    %101 = vector.broadcast %cst_69 : f32 to vector<1x56xf32>
    %102 = arith.maximumf %100, %101 : vector<1x56xf32>
    %c0_70 = arith.constant 0 : index
    %c0_71 = arith.constant 0 : index
    %c0_72 = arith.constant 0 : index
    %103 = vector.load %arg6[%c0_70, %c0_71, %c0_72] : memref<4x56x128xf32, #tpu.memory_space<vmem>>, vector<1x56x128xf32>
    %104 = vector.shape_cast %103 : vector<1x56x128xf32> to vector<56x128xf32>
    %cst_73 = arith.constant dense<0.000000e+00> : vector<1x128xf32>
    %105 = tpu.matmul %102, %104, %cst_73 {dimension_numbers = #tpu.dot_dimension_numbers<[1], [0], [0], [1], [0, 0, 1, 1], [], []>} : vector<1x56xf32>, vector<56x128xf32>, vector<1x128xf32> -> vector<1x128xf32>
    %106 = arith.addf %6, %105 : vector<1x128xf32>
    %107 = vector.extract_strided_slice %97 {offsets = [2, 0], sizes = [1, 56], strides = [1, 1]} : vector<8x56xf32> to vector<1x56xf32>
    %108 = vector.extract_strided_slice %97 {offsets = [3, 0], sizes = [1, 56], strides = [1, 1]} : vector<8x56xf32> to vector<1x56xf32>
    %109 = arith.maximumf %107, %108 : vector<1x56xf32>
    %cst_74 = arith.constant 0.000000e+00 : f32
    %110 = vector.broadcast %cst_74 : f32 to vector<1x56xf32>
    %111 = arith.maximumf %109, %110 : vector<1x56xf32>
    %c1_75 = arith.constant 1 : index
    %c0_76 = arith.constant 0 : index
    %c0_77 = arith.constant 0 : index
    %112 = vector.load %arg6[%c1_75, %c0_76, %c0_77] : memref<4x56x128xf32, #tpu.memory_space<vmem>>, vector<1x56x128xf32>
    %113 = vector.shape_cast %112 : vector<1x56x128xf32> to vector<56x128xf32>
    %cst_78 = arith.constant dense<0.000000e+00> : vector<1x128xf32>
    %114 = tpu.matmul %111, %113, %cst_78 {dimension_numbers = #tpu.dot_dimension_numbers<[1], [0], [0], [1], [0, 0, 1, 1], [], []>} : vector<1x56xf32>, vector<56x128xf32>, vector<1x128xf32> -> vector<1x128xf32>
    %115 = arith.addf %106, %114 : vector<1x128xf32>
    %116 = vector.extract_strided_slice %97 {offsets = [4, 0], sizes = [1, 56], strides = [1, 1]} : vector<8x56xf32> to vector<1x56xf32>
    %117 = vector.extract_strided_slice %97 {offsets = [5, 0], sizes = [1, 56], strides = [1, 1]} : vector<8x56xf32> to vector<1x56xf32>
    %118 = arith.maximumf %116, %117 : vector<1x56xf32>
    %cst_79 = arith.constant 0.000000e+00 : f32
    %119 = vector.broadcast %cst_79 : f32 to vector<1x56xf32>
    %120 = arith.maximumf %118, %119 : vector<1x56xf32>
    %c2_80 = arith.constant 2 : index
    %c0_81 = arith.constant 0 : index
    %c0_82 = arith.constant 0 : index
    %121 = vector.load %arg6[%c2_80, %c0_81, %c0_82] : memref<4x56x128xf32, #tpu.memory_space<vmem>>, vector<1x56x128xf32>
    %122 = vector.shape_cast %121 : vector<1x56x128xf32> to vector<56x128xf32>
    %cst_83 = arith.constant dense<0.000000e+00> : vector<1x128xf32>
    %123 = tpu.matmul %120, %122, %cst_83 {dimension_numbers = #tpu.dot_dimension_numbers<[1], [0], [0], [1], [0, 0, 1, 1], [], []>} : vector<1x56xf32>, vector<56x128xf32>, vector<1x128xf32> -> vector<1x128xf32>
    %124 = arith.addf %115, %123 : vector<1x128xf32>
    %125 = vector.extract_strided_slice %97 {offsets = [6, 0], sizes = [1, 56], strides = [1, 1]} : vector<8x56xf32> to vector<1x56xf32>
    %126 = vector.extract_strided_slice %97 {offsets = [7, 0], sizes = [1, 56], strides = [1, 1]} : vector<8x56xf32> to vector<1x56xf32>
    %127 = arith.maximumf %125, %126 : vector<1x56xf32>
    %cst_84 = arith.constant 0.000000e+00 : f32
    %128 = vector.broadcast %cst_84 : f32 to vector<1x56xf32>
    %129 = arith.maximumf %127, %128 : vector<1x56xf32>
    %c3_85 = arith.constant 3 : index
    %c0_86 = arith.constant 0 : index
    %c0_87 = arith.constant 0 : index
    %130 = vector.load %arg6[%c3_85, %c0_86, %c0_87] : memref<4x56x128xf32, #tpu.memory_space<vmem>>, vector<1x56x128xf32>
    %131 = vector.shape_cast %130 : vector<1x56x128xf32> to vector<56x128xf32>
    %cst_88 = arith.constant dense<0.000000e+00> : vector<1x128xf32>
    %132 = tpu.matmul %129, %131, %cst_88 {dimension_numbers = #tpu.dot_dimension_numbers<[1], [0], [0], [1], [0, 0, 1, 1], [], []>} : vector<1x56xf32>, vector<56x128xf32>, vector<1x128xf32> -> vector<1x128xf32>
    %133 = arith.addf %124, %132 : vector<1x128xf32>
    %c0_89 = arith.constant 0 : index
    %c0_90 = arith.constant 0 : index
    %c0_91 = arith.constant 0 : index
    %134 = vector.load %arg8[%c0_89, %c0_90, %c0_91] : memref<1x1x128xf32, #tpu.memory_space<vmem>>, vector<1x1x128xf32>
    %135 = vector.shape_cast %134 : vector<1x1x128xf32> to vector<1x128xf32>
    %136 = vector.shape_cast %133 : vector<1x128xf32> to vector<1x1x128xf32>
    tpu.vector_store %arg8[%c0_89, %c0_90, %c0_91], %136 {strides = array<i32>} : memref<1x1x128xf32, #tpu.memory_space<vmem>>, vector<1x1x128xf32>,
    return
  }
  func.func @transform_0(%arg0: i32) -> (i32, i32, i32) {
    %c0_i32 = arith.constant 0 : i32
    %c0_i32_0 = arith.constant 0 : i32
    %c0_i32_1 = arith.constant 0 : i32
    return %arg0, %c0_i32, %c0_i32_0 : i32, i32, i32
  }
  func.func @transform_1(%arg0: i32) -> (i32, i32, i32) {
    %c0_i32 = arith.constant 0 : i32
    %c0_i32_0 = arith.constant 0 : i32
    %c0_i32_1 = arith.constant 0 : i32
    %c0_i32_2 = arith.constant 0 : i32
    return %c0_i32, %c0_i32_0, %c0_i32_1 : i32, i32, i32
  }
  func.func @transform_2(%arg0: i32) -> (i32, i32) {
    %c0_i32 = arith.constant 0 : i32
    %c0_i32_0 = arith.constant 0 : i32
    %c0_i32_1 = arith.constant 0 : i32
    return %c0_i32, %c0_i32_0 : i32, i32
  }
  func.func @transform_3(%arg0: i32) -> (i32, i32, i32) {
    %c0_i32 = arith.constant 0 : i32
    %c0_i32_0 = arith.constant 0 : i32
    %c0_i32_1 = arith.constant 0 : i32
    %c0_i32_2 = arith.constant 0 : i32
    return %c0_i32, %c0_i32_0, %c0_i32_1 : i32, i32, i32
  }
  func.func @transform_4(%arg0: i32) -> (i32, i32) {
    %c0_i32 = arith.constant 0 : i32
    %c0_i32_0 = arith.constant 0 : i32
    %c0_i32_1 = arith.constant 0 : i32
    return %c0_i32, %c0_i32_0 : i32, i32
  }
  func.func @transform_5(%arg0: i32) -> (i32, i32, i32) {
    %c0_i32 = arith.constant 0 : i32
    %c0_i32_0 = arith.constant 0 : i32
    %c0_i32_1 = arith.constant 0 : i32
    %c0_i32_2 = arith.constant 0 : i32
    return %c0_i32, %c0_i32_0, %c0_i32_1 : i32, i32, i32
  }
  func.func @transform_6(%arg0: i32) -> (i32, i32) {
    %c0_i32 = arith.constant 0 : i32
    %c0_i32_0 = arith.constant 0 : i32
    %c0_i32_1 = arith.constant 0 : i32
    return %c0_i32, %c0_i32_0 : i32, i32
  }
  func.func @transform_7(%arg0: i32) -> (i32, i32, i32) {
    %c0_i32 = arith.constant 0 : i32
    %c0_i32_0 = arith.constant 0 : i32
    %c0_i32_1 = arith.constant 0 : i32
    return %arg0, %c0_i32, %c0_i32_0 : i32, i32, i32
  }
}

</mosaic_0001>

<llo_original>
// kernel: forward.1
$region0: #{forward.1}
  #allocation0 [shape = 'u32[]', space=smem, size = 0x4, offset = 0x4, fixed_abs, tag = 'smem constant byte address 0x4 - core index']
  #allocation1 [shape = 'u32[72,128]{1,0:T(1,128)}', space=vmem, size = 0x9000, scoped, tag = 'internal scratch']
  #allocation2 [shape = 'f32[18,16]{1,0:T(8,128)}', space=vmem, size = 0x3000, scoped, tag = 'scratch operand']
  #allocation3 [shape = 'f32[10,60]{1,0:T(8,128)}', space=vmem, size = 0x2000, scoped, tag = 'scratch operand']
  %s0 = inlined_call_operand.hbm [shape: f32[2,16,16], index: 0, kind: input, shape index: {}]
  %s1 = inlined_call_operand.hbm [shape: f32[3,16,64], index: 1, kind: input, shape index: {}]
  %s2 = inlined_call_operand.vmem [shape: f32[1,64], index: 2, kind: input, shape index: {}]
  %s3 = inlined_call_operand.hbm [shape: f32[3,60,64], index: 3, kind: input, shape index: {}]
  %s4 = inlined_call_operand.vmem [shape: f32[1,64], index: 4, kind: input, shape index: {}]
  %s5 = inlined_call_operand.hbm [shape: f32[4,56,128], index: 5, kind: input, shape index: {}]
  %s6 = inlined_call_operand.vmem [shape: f32[1,128], index: 6, kind: input, shape index: {}]
  %s7 = inlined_call_operand.hbm [shape: f32[2,1,128], index: 7, kind: output, shape index: {}]
  %s8 = sld [smem:[#allocation0]]
  $region77: #{forward.1} parent=0
    _
  %s10 = ssub.s32 1, %s8
  %s11 = scalar_select 0, %s10, %s8
  $region1: #{forward.1} parent=0
    #allocation4 [shape = 'u8[16384]{0}', space=vmem, size = 0x4000, scoped, tag = 'input window, operand 0']
    #allocation5 [shape = 's32[2]{0}', space=sflag, size = 0x8, scoped, tag = 'scoped memory for forward.1']
    #allocation6 [shape = 's32[2]{0}', space=sflag, size = 0x8, scoped, tag = 'scoped memory for forward.1']
    #allocation7 [shape = 'u8[24576]{0}', space=vmem, size = 0x6000, scoped, tag = 'input window, operand 1, single buffered']
    #allocation8 [shape = 's32[1]{0}', space=sflag, size = 0x4, scoped, tag = 'scoped memory for forward.1']
    #allocation9 [shape = 'u8[98304]{0}', space=vmem, size = 0x18000, scoped, tag = 'input window, operand 3, single buffered']
    #allocation10 [shape = 'u8[114688]{0}', space=vmem, size = 0x1c000, scoped, tag = 'input window, operand 5, single buffered']
    #allocation11 [shape = 's32[1]{0}', space=sflag, size = 0x4, scoped, tag = 'scoped memory for forward.1']
    #allocation12 [shape = 'u8[1024]{0}', space=vmem, size = 0x400, scoped, tag = 'output window, operand 0']
    %12 = vsyncpa [#allocation5], 0
    %s13 = scalar_lea.sflag [#allocation5], 1
    %14 = vsyncpa %s13, 0
    %15 = vsyncpa [#allocation8], 0
    %16 = vsyncpa [#allocation11], 0
    %17 = vsyncpa [#allocation6], 0
    %s18 = scalar_lea.sflag [#allocation6], 1
    %19 = vsyncpa %s18, 0
    loop: start=0, step=1, limit=4
    $region2: #{forward.1} parent=1 // loop_pre_header
      _
    $region3: #{forward.1} parent=1 // loop_header
      %s21 = sphi 0, %s25
      %p22 = scmp.ge.s32.totalorder %s21, 4
      %s31 = sphi 0, %s33
      %s34 = sphi 0, %s31
      %s35 = sphi 0, %s34
      %s51 = sphi 0, %s35
      %s55 = sphi 0, %s55
      %s57 = sphi 0, %s55
      %s58 = sphi 0, %s57
      %s72 = sphi 0, %s58
      %s76 = sphi 0, %s76
      %s78 = sphi 0, %s76
      %s79 = sphi 0, %s78
      %s93 = sphi 0, %s79
      %s97 = sphi 0, %s97
      %s99 = sphi 0, %s97
      %s100 = sphi 0, %s99
      %s114 = sphi 0, %s100
      %s118 = sphi 0, %s118
      %s120 = sphi 0, %s118
      %s121 = sphi 0, %s120
      %s135 = sphi 0, %s121
      %s139 = sphi 0, %s139
      %s141 = sphi 0, %s139
      %s142 = sphi 0, %s141
      %s156 = sphi 0, %s142
      %s160 = sphi 0, %s160
      %s162 = sphi 0, %s160
      %s163 = sphi 0, %s162
      %s177 = sphi 0, %s163
      %s183 = sphi 0, %s185
      %s186 = sphi 0, %s183
      %s187 = sphi 0, %s186
      %s203 = sphi 0, %s187
    $region4: #{forward.1} parent=1 // loop_header_branch
      %24 = sbr.rel (%p22) target = $region8
    $region5: #{forward.1} parent=1 // loop_body
      %s26 = ssub.s32 %s21, 1
      %s27 = ssub.s32 %s21, 2
      %s28 = sadd.s32 %s21, 1
      %s29 = ssub.s32 %s21, %s28
      %p30 = scmp.eq.s32.totalorder %s29, 0
      %s32 = sadd.s32 %s31, 1
      %s33 = scalar_select %p30, %s31, %s32
      %p36 = pneg %p30
      %p37 = scmp.eq.s32.totalorder %s21, 1
      %p38 = por %p36, %p37
      %p39 = scmp.ne.s32.totalorder %s31, %s34
      %p40 = scmp.eq.s32.totalorder %s21, 0
      %p41 = por %p39, %p40
      %p42 = scmp.ne.s32.totalorder %s31, %s34
      %p43 = scmp.eq.s32.totalorder %s26, 1
      %p44 = por %p42, %p43
      %p45 = scmp.ne.s32.totalorder %s34, %s35
      %p46 = scmp.eq.s32.totalorder %s26, 0
      %p47 = por %p45, %p46
      %p48 = scmp.ne.s32.totalorder %s34, %s35
      %p49 = scmp.eq.s32.totalorder %s27, 1
      %p50 = por %p48, %p49
      %p52 = scmp.ne.s32.totalorder %s35, %s51
      %p53 = scmp.eq.s32.totalorder %s27, 0
      %p54 = por %p52, %p53
      %s56 = sadd.s32 %s55, 1
      %p59 = scmp.eq.s32.totalorder %s21, 1
      %p60 = scmp.ne.s32.totalorder %s55, %s57
      %p61 = scmp.eq.s32.totalorder %s21, 0
      %p62 = por %p60, %p61
      %p63 = scmp.ne.s32.totalorder %s55, %s57
      %p64 = scmp.eq.s32.totalorder %s26, 1
      %p65 = por %p63, %p64
      %p66 = scmp.ne.s32.totalorder %s57, %s58
      %p67 = scmp.eq.s32.totalorder %s26, 0
      %p68 = por %p66, %p67
      %p69 = scmp.ne.s32.totalorder %s57, %s58
      %p70 = scmp.eq.s32.totalorder %s27, 1
      %p71 = por %p69, %p70
      %p73 = scmp.ne.s32.totalorder %s58, %s72
      %p74 = scmp.eq.s32.totalorder %s27, 0
      %p75 = por %p73, %p74
      %s77 = sadd.s32 %s76, 1
      %p80 = scmp.eq.s32.totalorder %s21, 1
      %p81 = scmp.ne.s32.totalorder %s76, %s78
      %p82 = scmp.eq.s32.totalorder %s21, 0
      %p83 = por %p81, %p82
      %p84 = scmp.ne.s32.totalorder %s76, %s78
      %p85 = scmp.eq.s32.totalorder %s26, 1
      %p86 = por %p84, %p85
      %p87 = scmp.ne.s32.totalorder %s78, %s79
      %p88 = scmp.eq.s32.totalorder %s26, 0
      %p89 = por %p87, %p88
      %p90 = scmp.ne.s32.totalorder %s78, %s79
      %p91 = scmp.eq.s32.totalorder %s27, 1
      %p92 = por %p90, %p91
      %p94 = scmp.ne.s32.totalorder %s79, %s93
      %p95 = scmp.eq.s32.totalorder %s27, 0
      %p96 = por %p94, %p95
      %s98 = sadd.s32 %s97, 1
      %p101 = scmp.eq.s32.totalorder %s21, 1
      %p102 = scmp.ne.s32.totalorder %s97, %s99
      %p103 = scmp.eq.s32.totalorder %s21, 0
      %p104 = por %p102, %p103
      %p105 = scmp.ne.s32.totalorder %s97, %s99
      %p106 = scmp.eq.s32.totalorder %s26, 1
      %p107 = por %p105, %p106
      %p108 = scmp.ne.s32.totalorder %s99, %s100
      %p109 = scmp.eq.s32.totalorder %s26, 0
      %p110 = por %p108, %p109
      %p111 = scmp.ne.s32.totalorder %s99, %s100
      %p112 = scmp.eq.s32.totalorder %s27, 1
      %p113 = por %p111, %p112
      %p115 = scmp.ne.s32.totalorder %s100, %s114
      %p116 = scmp.eq.s32.totalorder %s27, 0
      %p117 = por %p115, %p116
      %s119 = sadd.s32 %s118, 1
      %p122 = scmp.eq.s32.totalorder %s21, 1
      %p123 = scmp.ne.s32.totalorder %s118, %s120
      %p124 = scmp.eq.s32.totalorder %s21, 0
      %p125 = por %p123, %p124
      %p126 = scmp.ne.s32.totalorder %s118, %s120
      %p127 = scmp.eq.s32.totalorder %s26, 1
      %p128 = por %p126, %p127
      %p129 = scmp.ne.s32.totalorder %s120, %s121
      %p130 = scmp.eq.s32.totalorder %s26, 0
      %p131 = por %p129, %p130
      %p132 = scmp.ne.s32.totalorder %s120, %s121
      %p133 = scmp.eq.s32.totalorder %s27, 1
      %p134 = por %p132, %p133
      %p136 = scmp.ne.s32.totalorder %s121, %s135
      %p137 = scmp.eq.s32.totalorder %s27, 0
      %p138 = por %p136, %p137
      %s140 = sadd.s32 %s139, 1
      %p143 = scmp.eq.s32.totalorder %s21, 1
      %p144 = scmp.ne.s32.totalorder %s139, %s141
      %p145 = scmp.eq.s32.totalorder %s21, 0
      %p146 = por %p144, %p145
      %p147 = scmp.ne.s32.totalorder %s139, %s141
      %p148 = scmp.eq.s32.totalorder %s26, 1
      %p149 = por %p147, %p148
      %p150 = scmp.ne.s32.totalorder %s141, %s142
      %p151 = scmp.eq.s32.totalorder %s26, 0
      %p152 = por %p150, %p151
      %p153 = scmp.ne.s32.totalorder %s141, %s142
      %p154 = scmp.eq.s32.totalorder %s27, 1
      %p155 = por %p153, %p154
      %p157 = scmp.ne.s32.totalorder %s142, %s156
      %p158 = scmp.eq.s32.totalorder %s27, 0
      %p159 = por %p157, %p158
      %s161 = sadd.s32 %s160, 1
      %p164 = scmp.eq.s32.totalorder %s21, 1
      %p165 = scmp.ne.s32.totalorder %s160, %s162
      %p166 = scmp.eq.s32.totalorder %s21, 0
      %p167 = por %p165, %p166
      %p168 = scmp.ne.s32.totalorder %s160, %s162
      %p169 = scmp.eq.s32.totalorder %s26, 1
      %p170 = por %p168, %p169
      %p171 = scmp.ne.s32.totalorder %s162, %s163
      %p172 = scmp.eq.s32.totalorder %s26, 0
      %p173 = por %p171, %p172
      %p174 = scmp.ne.s32.totalorder %s162, %s163
      %p175 = scmp.eq.s32.totalorder %s27, 1
      %p176 = por %p174, %p175
      %p178 = scmp.ne.s32.totalorder %s163, %s177
      %p179 = scmp.eq.s32.totalorder %s27, 0
      %p180 = por %p178, %p179
      %s181 = ssub.s32 %s21, %s28
      %p182 = scmp.eq.s32.totalorder %s181, 0
      %s184 = sadd.s32 %s183, 1
      %s185 = scalar_select %p182, %s183, %s184
      %p188 = pneg %p182
      %p189 = scmp.eq.s32.totalorder %s21, 1
      %p190 = por %p188, %p189
      %p191 = scmp.ne.s32.totalorder %s183, %s186
      %p192 = scmp.eq.s32.totalorder %s21, 0
      %p193 = por %p191, %p192
      %p194 = scmp.ne.s32.totalorder %s183, %s186
      %p195 = scmp.eq.s32.totalorder %s26, 1
      %p196 = por %p194, %p195
      %p197 = scmp.ne.s32.totalorder %s186, %s187
      %p198 = scmp.eq.s32.totalorder %s26, 0
      %p199 = por %p197, %p198
      %p200 = scmp.ne.s32.totalorder %s186, %s187
      %p201 = scmp.eq.s32.totalorder %s27, 1
      %p202 = por %p200, %p201
      %p204 = scmp.ne.s32.totalorder %s187, %s203
      %p205 = scmp.eq.s32.totalorder %s27, 0
      %p206 = por %p204, %p205
      %p207 = scmp.le.s32.totalorder 1, %s21
      %p208 = scmp.lt.s32.totalorder %s21, 3
      %p209 = pnand %p207, %p208
      %p210 = pneg %p209
      // Predicated region
      $region9: #{forward.1} parent=5 // pred_check
        _
      $region10: #{forward.1} parent=5 // pred_check_branch
        %212 = sbr.rel (%p209) target = $region12
      $region11: #{forward.1} parent=5 // pred_region
        %s213 = ssub.s32 %s21, 1
        // Predicated region
        $region13: #{forward.1} parent=11 // pred_check
          %p214 = pneg %p68
        $region14: #{forward.1} parent=11 // pred_check_branch
          %216 = sbr.rel (%p214) target = $region16
        $region15: #{forward.1} parent=11 // pred_region
          %218 = vsyncadd [#allocation8], 0
          %s219 = sshll.u32 %s1, 4
          %s220 = int_to_ptr.hbm [resolvable:$true] %s219
          %s221 = sshll.u32 [#allocation7], 4
          %s222 = int_to_ptr.vmem [resolvable:$true] %s221
          %227 = dma.hbm_to_vmem [thread:$0]  %s220, 768, %s222, [#allocation8], 128, 128, 8
        $region16: #{forward.1} parent=11 // pred_fallthru
          _
        // Predicated region
        $region17: #{forward.1} parent=11 // pred_check
          %p228 = pneg %p89
        $region18: #{forward.1} parent=11 // pred_check_branch
          %230 = sbr.rel (%p228) target = $region20
        $region19: #{forward.1} parent=11 // pred_region
          _
        $region20: #{forward.1} parent=11 // pred_fallthru
          _
        // Predicated region
        $region21: #{forward.1} parent=11 // pred_check
          %p231 = pneg %p110
        $region22: #{forward.1} parent=11 // pred_check_branch
          %233 = sbr.rel (%p231) target = $region24
        $region23: #{forward.1} parent=11 // pred_region
          %235 = vsyncadd [#allocation8], 0
          %s236 = sshll.u32 %s3, 4
          %s237 = int_to_ptr.hbm [resolvable:$true] %s236
          %s238 = sshll.u32 [#allocation9], 4
          %s239 = int_to_ptr.vmem [resolvable:$true] %s238
          %244 = dma.hbm_to_vmem [thread:$0]  %s237, 3072, %s239, [#allocation8], 128, 128, 8
        $region24: #{forward.1} parent=11 // pred_fallthru
          _
        // Predicated region
        $region25: #{forward.1} parent=11 // pred_check
          %p245 = pneg %p131
        $region26: #{forward.1} parent=11 // pred_check_branch
          %247 = sbr.rel (%p245) target = $region28
        $region27: #{forward.1} parent=11 // pred_region
          _
        $region28: #{forward.1} parent=11 // pred_fallthru
          _
        // Predicated region
        $region29: #{forward.1} parent=11 // pred_check
          %p248 = pneg %p152
        $region30: #{forward.1} parent=11 // pred_check_branch
          %250 = sbr.rel (%p248) target = $region32
        $region31: #{forward.1} parent=11 // pred_region
          %252 = vsyncadd [#allocation11], 0
          %s253 = sshll.u32 %s5, 4
          %s254 = int_to_ptr.hbm [resolvable:$true] %s253
          %s255 = sshll.u32 [#allocation10], 4
          %s256 = int_to_ptr.vmem [resolvable:$true] %s255
          %261 = dma.hbm_to_vmem [thread:$0]  %s254, 3584, %s256, [#allocation11], 128, 128, 8
        $region32: #{forward.1} parent=11 // pred_fallthru
          _
        // Predicated region
        $region33: #{forward.1} parent=11 // pred_check
          %p262 = pneg %p173
        $region34: #{forward.1} parent=11 // pred_check_branch
          %264 = sbr.rel (%p262) target = $region36
        $region35: #{forward.1} parent=11 // pred_region
          _
        $region36: #{forward.1} parent=11 // pred_fallthru
          _
      $region12: #{forward.1} parent=5 // pred_fallthru
        _
      %p265 = scmp.lt.s32.totalorder %s21, 2
      // Predicated region
      $region37: #{forward.1} parent=5 // pred_check
        %p266 = pneg %p265
      $region38: #{forward.1} parent=5 // pred_check_branch
        %268 = sbr.rel (%p266) target = $region40
      $region39: #{forward.1} parent=5 // pred_region
        // Predicated region
        $region41: #{forward.1} parent=39 // pred_check
          %p269 = pneg %p41
        $region42: #{forward.1} parent=39 // pred_check_branch
          %271 = sbr.rel (%p269) target = $region44
        $region43: #{forward.1} parent=39 // pred_region
          %s272 = sand.u32 %s31, 1
          %s273 = scalar_lea.sflag [#allocation5], %s272
          %s274 = sand.u32 %s31, 1
          %s275 = smul.addr %s274, 16
          %s276 = scalar_lea.vmem [#allocation4], %s275
          %278 = vsyncadd %s273, 0
          %s279 = smul.addr %s21, 2
          %s280 = smul.addr %s279, 8
          %s281 = scalar_lea.hbm %s0, %s280
          %s282 = sshll.u32 %s281, 4
          %s283 = int_to_ptr.hbm [resolvable:$true] %s282
          %s284 = sshll.u32 %s276, 4
          %s285 = int_to_ptr.vmem [resolvable:$true] %s284
          %290 = dma.hbm_to_vmem [thread:$0]  %s283, 256, %s285, %s273, 128, 128, 8
        $region44: #{forward.1} parent=39 // pred_fallthru
          _
      $region40: #{forward.1} parent=5 // pred_fallthru
        _
      %p291 = scmp.le.s32.totalorder 1, %s21
      %p292 = scmp.lt.s32.totalorder %s21, 3
      %p293 = pnand %p291, %p292
      %p294 = pneg %p293
      // Predicated region
      $region45: #{forward.1} parent=5 // pred_check
        _
      $region46: #{forward.1} parent=5 // pred_check_branch
        %296 = sbr.rel (%p293) target = $region48
      $region47: #{forward.1} parent=5 // pred_region
        %s297 = ssub.s32 %s21, 1
        %s298 = sand.u32 %s34, 1
        %s299 = scalar_lea.sflag [#allocation5], %s298
        %s300 = sand.u32 %s34, 1
        %s301 = smul.addr %s300, 16
        %s302 = scalar_lea.vmem [#allocation4], %s301
        // Predicated region
        $region49: #{forward.1} parent=47 // pred_check
          %p303 = pneg %p47
        $region50: #{forward.1} parent=47 // pred_check_branch
          %305 = sbr.rel (%p303) target = $region52
        $region51: #{forward.1} parent=47 // pred_region
          %307 = dma.done %s299, 256
        $region52: #{forward.1} parent=47 // pred_fallthru
          _
        // Predicated region
        $region53: #{forward.1} parent=47 // pred_check
          %p308 = pneg %p68
        $region54: #{forward.1} parent=47 // pred_check_branch
          %310 = sbr.rel (%p308) target = $region56
        $region55: #{forward.1} parent=47 // pred_region
          %312 = dma.done [#allocation8], 768
        $region56: #{forward.1} parent=47 // pred_fallthru
          _
        // Predicated region
        $region57: #{forward.1} parent=47 // pred_check
          %p313 = pneg %p110
        $region58: #{forward.1} parent=47 // pred_check_branch
          %315 = sbr.rel (%p313) target = $region60
        $region59: #{forward.1} parent=47 // pred_region
          %317 = dma.done [#allocation8], 3072
        $region60: #{forward.1} parent=47 // pred_fallthru
          _
        // Predicated region
        $region61: #{forward.1} parent=47 // pred_check
          %p318 = pneg %p152
        $region62: #{forward.1} parent=47 // pred_check_branch
          %320 = sbr.rel (%p318) target = $region64
        $region63: #{forward.1} parent=47 // pred_region
          %322 = dma.done [#allocation11], 3584
        $region64: #{forward.1} parent=47 // pred_fallthru
          _
        %s323 = sand.u32 %s34, 1
        %s324 = scalar_lea.sflag [#allocation5], %s323
        %s325 = sand.u32 %s34, 1
        %s326 = smul.addr %s325, 16
        %s327 = scalar_lea.vmem [#allocation4], %s326
        %p328 = pneg %p47
        %p329 = pneg %p44
        %p330 = pneg %p68
        %p331 = pneg %p65
        %p332 = pneg %p89
        %p333 = pneg %p86
        %p334 = pneg %p110
        %p335 = pneg %p107
        %p336 = pneg %p131
        %p337 = pneg %p128
        %p338 = pneg %p152
        %p339 = pneg %p149
        %p340 = pneg %p173
        %p341 = pneg %p170
        %p342 = pneg %p199
        %p343 = pneg %p196
        %s344 = sand.u32 %s186, 1
        %s345 = scalar_lea.sflag [#allocation6], %s344
        %s346 = sand.u32 %s186, 1
        %s347 = scalar_lea.vmem [#allocation12], %s346
        %vm348 = vcmask 122880
        %349 = vst.msk [vmem:[#allocation2] sm:$0x1] %vm348, 0.0
        %350 = vst.msk [vmem:[#allocation2 + $0x11] sm:$0x1] %vm348, 0.0
        %v351 = vld [vmem:[%s302] sm:$0xff]
        %v352 = vld [vmem:[%s302 + $0x8] sm:$0xff]
        %vm353 = vcmask 130048
        %354 = vst.msk [vmem:[#allocation2 + $0x1] sm:$0xff] %vm353, %v351
        %355 = vst.msk [vmem:[#allocation2 + $0x9] sm:$0xff] %vm353, %v352
        %v356 = vld [vmem:[%s6] sm:$0x1]
        %v357 = vld [vmem:[#allocation2] sm:$0xff]
        %v358 = vld [vmem:[#allocation2 + $0x8] sm:$0xff]
        %v359 = vld [vmem:[#allocation7] sm:$0xff]
        %v360 = vld [vmem:[#allocation7 + $0x8] sm:$0xff]
        %v361 = vld [vmem:[#allocation2 + $0x1] sm:$0xff]
        %v362 = vld [vmem:[#allocation2 + $0x9] sm:$0xff]
        %s363 = scalar_lea.vmem [#allocation7], 16
        %v364 = vld [vmem:[%s363] sm:$0xff]
        %v365 = vld [vmem:[%s363 + $0x8] sm:$0xff]
        %v367 = vsel %vm353, %v361, 0
        %v370 = vsel %vm353, %v362, 0
        %372 = vmatpush.msra.mxu0 0.0
        %373 = vmatpush.msra.mxu0 0.0
        %374 = vmatpush.msra.mxu0 0.0
        %375 = vmatpush.msra.mxu0 0.0
        %376 = vmatpush.msra.mxu0 0.0
        %377 = vmatpush.msra.mxu0 0.0
        %378 = vmatpush.msra.mxu0 0.0
        %379 = vmatpush.msra.mxu0 0.0
        %380 = vmatpush.msra.mxu0 0.0
        %381 = vmatpush.msra.mxu0 0.0
        %382 = vmatpush.msra.mxu0 0.0
        %383 = vmatpush.msra.mxu0 0.0
        %384 = vmatpush.msra.mxu0 0.0
        %385 = vmatpush.msra.mxu0 0.0
        %386 = vmatpush.msra.mxu0 %v365
        %387 = vmatpush.msra.mxu0 %v364
        %388 = vmatmul.f32.gmra.mxu0 %v367
        %v389 = vpop.f32.mrf.mxu0
        %v390 = vadd.f32 0.0, %v389
        %391 = vmatmul.f32.gmra.mxu0 %v370
        %v392 = vpop.f32.mrf.mxu0
        %v393 = vadd.f32 0.0, %v392
        %394 = vdwg.mxu0
        %v396 = vsel %vm353, %v357, 0
        %v399 = vsel %vm353, %v358, 0
        %401 = vmatpush.msra.mxu0 0.0
        %402 = vmatpush.msra.mxu0 0.0
        %403 = vmatpush.msra.mxu0 0.0
        %404 = vmatpush.msra.mxu0 0.0
        %405 = vmatpush.msra.mxu0 0.0
        %406 = vmatpush.msra.mxu0 0.0
        %407 = vmatpush.msra.mxu0 0.0
        %408 = vmatpush.msra.mxu0 0.0
        %409 = vmatpush.msra.mxu0 0.0
        %410 = vmatpush.msra.mxu0 0.0
        %411 = vmatpush.msra.mxu0 0.0
        %412 = vmatpush.msra.mxu0 0.0
        %413 = vmatpush.msra.mxu0 0.0
        %414 = vmatpush.msra.mxu0 0.0
        %415 = vmatpush.msra.mxu0 %v360
        %416 = vmatpush.msra.mxu0 %v359
        %417 = vmatmul.f32.gmra.mxu0 %v396
        %v418 = vpop.f32.mrf.mxu0
        %v419 = vadd.f32 %v390, %v418
        %420 = vmatmul.f32.gmra.mxu0 %v399
        %v421 = vpop.f32.mrf.mxu0
        %v422 = vadd.f32 %v393, %v421
        %423 = vdwg.mxu0
        %v424 = vld [vmem:[#allocation2 + $0x2] sm:$0xff]
        %v425 = vld [vmem:[#allocation2 + $0xa] sm:$0xff]
        %s426 = scalar_lea.vmem [#allocation7], 32
        %v427 = vld [vmem:[%s426] sm:$0xff]
        %v428 = vld [vmem:[%s426 + $0x8] sm:$0xff]
        %v430 = vsel %vm353, %v424, 0
        %v433 = vsel %vm353, %v425, 0
        %435 = vmatpush.msra.mxu0 0.0
        %436 = vmatpush.msra.mxu0 0.0
        %437 = vmatpush.msra.mxu0 0.0
        %438 = vmatpush.msra.mxu0 0.0
        %439 = vmatpush.msra.mxu0 0.0
        %440 = vmatpush.msra.mxu0 0.0
        %441 = vmatpush.msra.mxu0 0.0
        %442 = vmatpush.msra.mxu0 0.0
        %443 = vmatpush.msra.mxu0 0.0
        %444 = vmatpush.msra.mxu0 0.0
        %445 = vmatpush.msra.mxu0 0.0
        %446 = vmatpush.msra.mxu0 0.0
        %447 = vmatpush.msra.mxu0 0.0
        %448 = vmatpush.msra.mxu0 0.0
        %449 = vmatpush.msra.mxu0 %v428
        %450 = vmatpush.msra.mxu0 %v427
        %451 = vmatmul.f32.gmra.mxu0 %v430
        %v452 = vpop.f32.mrf.mxu0
        %v453 = vadd.f32 0.0, %v452
        %454 = vmatmul.f32.gmra.mxu0 %v433
        %v455 = vpop.f32.mrf.mxu0
        %v456 = vadd.f32 0.0, %v455
        %457 = vdwg.mxu0
        %v458 = vadd.f32 %v419, %v453
        %v459 = vadd.f32 %v422, %v456
        %v460 = vld [vmem:[%s2] sm:$0x1]
        %v462 = vperm.slane %v460, 0
        %v464 = vadd.f32 %v458, %v462
        %v465 = vadd.f32 %v459, %v462
        %468 = vrot.lane.b32.xlu0 %v464, 124
        %v469 = vpop.permute.xlu0 %468
        %470 = vrot.lane.b32.xlu0 %v465, 124
        %v471 = vpop.permute.xlu0 %470
        %v474 = vmax.f32 %v464, %v469
        %v475 = vmax.f32 %v465, %v471
        %vm476 = vcmask 483328
        %477 = vst.msk [vmem:[#allocation3] sm:$0x1] %vm476, 0.0
        %478 = vst.msk [vmem:[#allocation3 + $0x9] sm:$0x1] %vm476, 0.0
        %v480 = vrot.slane %v474, 1
        %v482 = vmax.f32 %v474, %v480
        %v483 = vmax.f32 %v482, 0.0
        %484 = vst.msk [vmem:[#allocation3 + $0x1] sm:$0x1] %vm476, %v483
        %vm485 = vcmask 485378
        %486 = vst.msk [vmem:[#allocation3] sm:$0x4] %vm485, %v483
        %vm487 = vcmask 487428
        %488 = vst.msk [vmem:[#allocation3 - $0x1] sm:$0x10] %vm487, %v483
        %vm489 = vcmask 489478
        %490 = vst.msk [vmem:[#allocation3 - $0x2] sm:$0x40] %vm489, %v483
        %v492 = vrot.slane %v475, 1
        %v494 = vmax.f32 %v475, %v492
        %v495 = vmax.f32 %v494, 0.0
        %496 = vst.msk [vmem:[#allocation3 + $0x5] sm:$0x1] %vm476, %v495
        %497 = vst.msk [vmem:[#allocation3 + $0x4] sm:$0x4] %vm485, %v495
        %498 = vst.msk [vmem:[#allocation3 + $0x3] sm:$0x10] %vm487, %v495
        %499 = vst.msk [vmem:[#allocation3 + $0x2] sm:$0x40] %vm489, %v495
        %v500 = vld [vmem:[#allocation3] sm:$0xff]
        %v501 = vld [vmem:[#allocation9] sm:$0xff]
        %v502 = vld [vmem:[#allocation9 + $0x8] sm:$0xff]
        %v503 = vld [vmem:[#allocation9 + $0x10] sm:$0xff]
        %v504 = vld [vmem:[#allocation9 + $0x18] sm:$0xff]
        %v505 = vld [vmem:[#allocation9 + $0x20] sm:$0xff]
        %v506 = vld [vmem:[#allocation9 + $0x28] sm:$0xff]
        %v507 = vld [vmem:[#allocation9 + $0x30] sm:$0xff]
        %v508 = vld [vmem:[#allocation9 + $0x38] sm:$0xf]
        %v509 = vld [vmem:[#allocation3 + $0x1] sm:$0xff]
        %s510 = scalar_lea.vmem [#allocation9], 64
        %v511 = vld [vmem:[%s510] sm:$0xff]
        %v512 = vld [vmem:[%s510 + $0x8] sm:$0xff]
        %v513 = vld [vmem:[%s510 + $0x10] sm:$0xff]
        %v514 = vld [vmem:[%s510 + $0x18] sm:$0xff]
        %v515 = vld [vmem:[%s510 + $0x20] sm:$0xff]
        %v516 = vld [vmem:[%s510 + $0x28] sm:$0xff]
        %v517 = vld [vmem:[%s510 + $0x30] sm:$0xff]
        %v518 = vld [vmem:[%s510 + $0x38] sm:$0xf]
        %vm519 = vcmask 490496
        %v521 = vsel %vm519, %v509, 0
        %vm523 = vcmask 1043456
        %v525 = vsel %vm523, %v518, 0
        %527 = vmatpush.msra.mxu0 0.0
        %528 = vmatpush.msra.mxu0 0.0
        %529 = vmatpush.msra.mxu0 0.0
        %530 = vmatpush.msra.mxu0 0.0
        %531 = vmatpush.msra.mxu0 0.0
        %532 = vmatpush.msra.mxu0 0.0
        %533 = vmatpush.msra.mxu0 0.0
        %534 = vmatpush.msra.mxu0 0.0
        %535 = vmatpush.msra.mxu0 %v525
        %536 = vmatpush.msra.mxu0 %v517
        %537 = vmatpush.msra.mxu0 %v516
        %538 = vmatpush.msra.mxu0 %v515
        %539 = vmatpush.msra.mxu0 %v514
        %540 = vmatpush.msra.mxu0 %v513
        %541 = vmatpush.msra.mxu0 %v512
        %542 = vmatpush.msra.mxu0 %v511
        %543 = vmatmul.f32.gmra.mxu0 %v521
        %v544 = vpop.f32.mrf.mxu0
        %v545 = vadd.f32 0.0, %v544
        %546 = vdwg.mxu0
        %v548 = vsel %vm519, %v500, 0
        %v551 = vsel %vm523, %v508, 0
        %553 = vmatpush.msra.mxu0 0.0
        %554 = vmatpush.msra.mxu0 0.0
        %555 = vmatpush.msra.mxu0 0.0
        %556 = vmatpush.msra.mxu0 0.0
        %557 = vmatpush.msra.mxu0 0.0
        %558 = vmatpush.msra.mxu0 0.0
        %559 = vmatpush.msra.mxu0 0.0
        %560 = vmatpush.msra.mxu0 0.0
        %561 = vmatpush.msra.mxu0 %v551
        %562 = vmatpush.msra.mxu0 %v507
        %563 = vmatpush.msra.mxu0 %v506
        %564 = vmatpush.msra.mxu0 %v505
        %565 = vmatpush.msra.mxu0 %v504
        %566 = vmatpush.msra.mxu0 %v503
        %567 = vmatpush.msra.mxu0 %v502
        %568 = vmatpush.msra.mxu0 %v501
        %569 = vmatmul.f32.gmra.mxu0 %v548
        %v570 = vpop.f32.mrf.mxu0
        %v571 = vadd.f32 %v545, %v570
        %572 = vdwg.mxu0
        %v573 = vld [vmem:[#allocation3 + $0x2] sm:$0xff]
        %s574 = scalar_lea.vmem [#allocation9], 128
        %v575 = vld [vmem:[%s574] sm:$0xff]
        %v576 = vld [vmem:[%s574 + $0x8] sm:$0xff]
        %v577 = vld [vmem:[%s574 + $0x10] sm:$0xff]
        %v578 = vld [vmem:[%s574 + $0x18] sm:$0xff]
        %v579 = vld [vmem:[%s574 + $0x20] sm:$0xff]
        %v580 = vld [vmem:[%s574 + $0x28] sm:$0xff]
        %v581 = vld [vmem:[%s574 + $0x30] sm:$0xff]
        %v582 = vld [vmem:[%s574 + $0x38] sm:$0xf]
        %v584 = vsel %vm519, %v573, 0
        %v587 = vsel %vm523, %v582, 0
        %589 = vmatpush.msra.mxu0 0.0
        %590 = vmatpush.msra.mxu0 0.0
        %591 = vmatpush.msra.mxu0 0.0
        %592 = vmatpush.msra.mxu0 0.0
        %593 = vmatpush.msra.mxu0 0.0
        %594 = vmatpush.msra.mxu0 0.0
        %595 = vmatpush.msra.mxu0 0.0
        %596 = vmatpush.msra.mxu0 0.0
        %597 = vmatpush.msra.mxu0 %v587
        %598 = vmatpush.msra.mxu0 %v581
        %599 = vmatpush.msra.mxu0 %v580
        %600 = vmatpush.msra.mxu0 %v579
        %601 = vmatpush.msra.mxu0 %v578
        %602 = vmatpush.msra.mxu0 %v577
        %603 = vmatpush.msra.mxu0 %v576
        %604 = vmatpush.msra.mxu0 %v575
        %605 = vmatmul.f32.gmra.mxu0 %v584
        %v606 = vpop.f32.mrf.mxu0
        %v607 = vadd.f32 0.0, %v606
        %608 = vdwg.mxu0
        %v609 = vadd.f32 %v571, %v607
        %v610 = vld [vmem:[%s4] sm:$0x1]
        %v612 = vperm.slane %v610, 0
        %v614 = vadd.f32 %v609, %v612
        %616 = vrot.lane.b32.xlu0 %v614, 120
        %v617 = vpop.permute.xlu0 %616
        %v619 = vmax.f32 %v614, %v617
        %v621 = vrot.slane %v619, 1
        %v623 = vmax.f32 %v619, %v621
        %v624 = vmax.f32 %v623, 0.0
        %v625 = vld [vmem:[#allocation10] sm:$0xff]
        %v626 = vld [vmem:[#allocation10 + $0x8] sm:$0xff]
        %v627 = vld [vmem:[#allocation10 + $0x10] sm:$0xff]
        %v628 = vld [vmem:[#allocation10 + $0x18] sm:$0xff]
        %v629 = vld [vmem:[#allocation10 + $0x20] sm:$0xff]
        %v630 = vld [vmem:[#allocation10 + $0x28] sm:$0xff]
        %v631 = vld [vmem:[#allocation10 + $0x30] sm:$0xff]
        %vm632 = vcmask 457728
        %v634 = vsel %vm632, %v624, 0
        %636 = vmatpush.msra.mxu0 0.0
        %637 = vmatpush.msra.mxu0 0.0
        %638 = vmatpush.msra.mxu0 0.0
        %639 = vmatpush.msra.mxu0 0.0
        %640 = vmatpush.msra.mxu0 0.0
        %641 = vmatpush.msra.mxu0 0.0
        %642 = vmatpush.msra.mxu0 0.0
        %643 = vmatpush.msra.mxu0 0.0
        %644 = vmatpush.msra.mxu0 0.0
        %645 = vmatpush.msra.mxu0 %v631
        %646 = vmatpush.msra.mxu0 %v630
        %647 = vmatpush.msra.mxu0 %v629
        %648 = vmatpush.msra.mxu0 %v628
        %649 = vmatpush.msra.mxu0 %v627
        %650 = vmatpush.msra.mxu0 %v626
        %651 = vmatpush.msra.mxu0 %v625
        %652 = vmatmul.f32.gmra.mxu0 %v634
        %v653 = vpop.f32.mrf.mxu0
        %v654 = vadd.f32 0.0, %v653
        %655 = vdwg.mxu0
        %v656 = vadd.f32 %v356, %v654
        %s657 = scalar_lea.vmem [#allocation10], 56
        %v658 = vld [vmem:[%s657] sm:$0xff]
        %v659 = vld [vmem:[%s657 + $0x8] sm:$0xff]
        %v660 = vld [vmem:[%s657 + $0x10] sm:$0xff]
        %v661 = vld [vmem:[%s657 + $0x18] sm:$0xff]
        %v662 = vld [vmem:[%s657 + $0x20] sm:$0xff]
        %v663 = vld [vmem:[%s657 + $0x28] sm:$0xff]
        %v664 = vld [vmem:[%s657 + $0x30] sm:$0xff]
        %v665 = vrot.slane %v624, 2
        %v666 = vsel %vm632, %v665, 0
        %668 = vmatpush.msra.mxu0 0.0
        %669 = vmatpush.msra.mxu0 0.0
        %670 = vmatpush.msra.mxu0 0.0
        %671 = vmatpush.msra.mxu0 0.0
        %672 = vmatpush.msra.mxu0 0.0
        %673 = vmatpush.msra.mxu0 0.0
        %674 = vmatpush.msra.mxu0 0.0
        %675 = vmatpush.msra.mxu0 0.0
        %676 = vmatpush.msra.mxu0 0.0
        %677 = vmatpush.msra.mxu0 %v664
        %678 = vmatpush.msra.mxu0 %v663
        %679 = vmatpush.msra.mxu0 %v662
        %680 = vmatpush.msra.mxu0 %v661
        %681 = vmatpush.msra.mxu0 %v660
        %682 = vmatpush.msra.mxu0 %v659
        %683 = vmatpush.msra.mxu0 %v658
        %684 = vmatmul.f32.gmra.mxu0 %v666
        %v685 = vpop.f32.mrf.mxu0
        %v686 = vadd.f32 0.0, %v685
        %687 = vdwg.mxu0
        %v688 = vadd.f32 %v656, %v686
        %s689 = scalar_lea.vmem [#allocation10], 112
        %v690 = vld [vmem:[%s689] sm:$0xff]
        %v691 = vld [vmem:[%s689 + $0x8] sm:$0xff]
        %v692 = vld [vmem:[%s689 + $0x10] sm:$0xff]
        %v693 = vld [vmem:[%s689 + $0x18] sm:$0xff]
        %v694 = vld [vmem:[%s689 + $0x20] sm:$0xff]
        %v695 = vld [vmem:[%s689 + $0x28] sm:$0xff]
        %v696 = vld [vmem:[%s689 + $0x30] sm:$0xff]
        %v697 = vrot.slane %v624, 4
        %v698 = vsel %vm632, %v697, 0
        %700 = vmatpush.msra.mxu0 0.0
        %701 = vmatpush.msra.mxu0 0.0
        %702 = vmatpush.msra.mxu0 0.0
        %703 = vmatpush.msra.mxu0 0.0
        %704 = vmatpush.msra.mxu0 0.0
        %705 = vmatpush.msra.mxu0 0.0
        %706 = vmatpush.msra.mxu0 0.0
        %707 = vmatpush.msra.mxu0 0.0
        %708 = vmatpush.msra.mxu0 0.0
        %709 = vmatpush.msra.mxu0 %v696
        %710 = vmatpush.msra.mxu0 %v695
        %711 = vmatpush.msra.mxu0 %v694
        %712 = vmatpush.msra.mxu0 %v693
        %713 = vmatpush.msra.mxu0 %v692
        %714 = vmatpush.msra.mxu0 %v691
        %715 = vmatpush.msra.mxu0 %v690
        %716 = vmatmul.f32.gmra.mxu0 %v698
        %v717 = vpop.f32.mrf.mxu0
        %v718 = vadd.f32 0.0, %v717
        %719 = vdwg.mxu0
        %v720 = vadd.f32 %v688, %v718
        %s721 = scalar_lea.vmem [#allocation10], 168
        %v722 = vld [vmem:[%s721] sm:$0xff]
        %v723 = vld [vmem:[%s721 + $0x8] sm:$0xff]
        %v724 = vld [vmem:[%s721 + $0x10] sm:$0xff]
        %v725 = vld [vmem:[%s721 + $0x18] sm:$0xff]
        %v726 = vld [vmem:[%s721 + $0x20] sm:$0xff]
        %v727 = vld [vmem:[%s721 + $0x28] sm:$0xff]
        %v728 = vld [vmem:[%s721 + $0x30] sm:$0xff]
        %v729 = vrot.slane %v624, 6
        %v730 = vsel %vm632, %v729, 0
        %732 = vmatpush.msra.mxu0 0.0
        %733 = vmatpush.msra.mxu0 0.0
        %734 = vmatpush.msra.mxu0 0.0
        %735 = vmatpush.msra.mxu0 0.0
        %736 = vmatpush.msra.mxu0 0.0
        %737 = vmatpush.msra.mxu0 0.0
        %738 = vmatpush.msra.mxu0 0.0
        %739 = vmatpush.msra.mxu0 0.0
        %740 = vmatpush.msra.mxu0 0.0
        %741 = vmatpush.msra.mxu0 %v728
        %742 = vmatpush.msra.mxu0 %v727
        %743 = vmatpush.msra.mxu0 %v726
        %744 = vmatpush.msra.mxu0 %v725
        %745 = vmatpush.msra.mxu0 %v724
        %746 = vmatpush.msra.mxu0 %v723
        %747 = vmatpush.msra.mxu0 %v722
        %748 = vmatmul.f32.gmra.mxu0 %v730
        %v749 = vpop.f32.mrf.mxu0
        %v750 = vadd.f32 0.0, %v749
        %751 = vdwg.mxu0
        %v752 = vadd.f32 %v720, %v750
        %753 = vst [vmem:[%s347] sm:$0x1] %v752
        %s754 = sand.u32 %s186, 1
        %s755 = scalar_lea.sflag [#allocation6], %s754
        %s756 = sand.u32 %s186, 1
        %s757 = scalar_lea.vmem [#allocation12], %s756
        // Predicated region
        $region65: #{forward.1} parent=47 // pred_check
          %p758 = pneg %p196
        $region66: #{forward.1} parent=47 // pred_check_branch
          %760 = sbr.rel (%p758) target = $region68
        $region67: #{forward.1} parent=47 // pred_region
          %762 = vsyncadd %s755, 0
          %s763 = scalar_lea.hbm %s7, %s26
          %s765 = sshll.u32 %s757, 4
          %s766 = int_to_ptr.vmem [resolvable:$true] %s765
          %s767 = sshll.u32 %s763, 4
          %s768 = int_to_ptr.hbm [resolvable:$true] %s767
          %770 = dma.vmem_to_hbm [thread:$0]  %s766, 16, %s768, %s755
        $region68: #{forward.1} parent=47 // pred_fallthru
          _
      $region48: #{forward.1} parent=5 // pred_fallthru
        _
      %p771 = scmp.le.s32.totalorder 2, %s21
      // Predicated region
      $region69: #{forward.1} parent=5 // pred_check
        %p772 = pneg %p771
      $region70: #{forward.1} parent=5 // pred_check_branch
        %774 = sbr.rel (%p772) target = $region72
      $region71: #{forward.1} parent=5 // pred_region
        %s775 = ssub.s32 %s21, 2
        // Predicated region
        $region73: #{forward.1} parent=71 // pred_check
          %p776 = pneg %p202
        $region74: #{forward.1} parent=71 // pred_check_branch
          %778 = sbr.rel (%p776) target = $region76
        $region75: #{forward.1} parent=71 // pred_region
          %s779 = sand.u32 %s187, 1
          %s780 = scalar_lea.sflag [#allocation6], %s779
          %s781 = sand.u32 %s187, 1
          %s782 = scalar_lea.vmem [#allocation12], %s781
          %784 = dma.done %s780, 16
        $region76: #{forward.1} parent=71 // pred_fallthru
          _
      $region72: #{forward.1} parent=5 // pred_fallthru
        _
    $region6: #{forward.1} parent=1 // loop_footer
      %s25 = sadd.s32 1, %s21
    $region7: #{forward.1} parent=1 // loop_footer_branch
      %20 = sbr.rel target = $region3
    $region8: #{forward.1} parent=1 // loop_exit
      _
    %785 = vsyncpa [#allocation5], 1
    %s786 = scalar_lea.sflag [#allocation5], 1
    %787 = vsyncpa %s786, 1
    %788 = vsyncpa [#allocation8], 1
    %789 = vsyncpa [#allocation11], 1
    %790 = vsyncpa [#allocation6], 1
    %s791 = scalar_lea.sflag [#allocation6], 1
    %792 = vsyncpa %s791, 1

</llo_original>
